<compile_context>
chip_gen: v7x
topology: tpu7x:2x2x1
jax: 0.10.0
libtpu: 0.0.40
codegen_flags: <defaults>
</compile_context>

<pallas_src>
import functools

import jax
import jax.numpy as jnp
from jax.experimental import pallas as pl
from jax.experimental.pallas import tpu as pltpu


_LANE = 128          # lane width (last dim of a vreg)
_BF16_SUBLANE = 16   # bf16 sublane quantum (second-to-last dim)


def _round_up(x, m):
    return (x + m - 1) // m * m


def _vmem_capacity_bytes():
    try:
        return int(pltpu.get_tpu_info().vmem_capacity_bytes)
    except Exception:
        return 64 << 20   # conservative default (v7x per-TC VMEM)


# --------------------------------------------------------------------------- #
# Kernels
# --------------------------------------------------------------------------- #
def _mlp_resident_kernel(x_ref, w_in_ref, b_in_ref, w_hid_ref, b_hid_ref,
                         w_out_ref, b_out_ref, o_ref, *, num_hidden_layers):
    """One batch tile; all weights VMEM-resident, static unroll over layers."""
    compute_dtype = w_in_ref.dtype

    h = jnp.dot(x_ref[...], w_in_ref[...], preferred_element_type=jnp.float32)
    h = jnp.maximum(h + b_in_ref[...], 0.0).astype(compute_dtype)

    for l in range(num_hidden_layers):
        h = jnp.dot(h, w_hid_ref[l], preferred_element_type=jnp.float32)
        h = jnp.maximum(h + b_hid_ref[l], 0.0).astype(compute_dtype)

    out = jnp.dot(h, w_out_ref[...], preferred_element_type=jnp.float32)
    o_ref[...] = (out + b_out_ref[...]).astype(o_ref.dtype)


def _mlp_streaming_kernel(x_ref, w_in_ref, b_in_ref, w_hid_ref, b_hid_ref,
                          w_out_ref, b_out_ref, o_ref, h_ref):
    """One (batch tile, hidden layer) grid point; hidden weights streamed."""
    l = pl.program_id(1)
    compute_dtype = h_ref.dtype

    @pl.when(l == 0)
    def _():
        h = jnp.dot(x_ref[...], w_in_ref[...],
                    preferred_element_type=jnp.float32)
        h_ref[...] = jnp.maximum(h + b_in_ref[...], 0.0).astype(compute_dtype)

    h = jnp.dot(h_ref[...], w_hid_ref[0], preferred_element_type=jnp.float32)
    h_ref[...] = jnp.maximum(h + b_hid_ref[0], 0.0).astype(compute_dtype)

    @pl.when(l == pl.num_programs(1) - 1)
    def _():
        out = jnp.dot(h_ref[...], w_out_ref[...],
                      preferred_element_type=jnp.float32)
        o_ref[...] = (out + b_out_ref[...]).astype(o_ref.dtype)


# --------------------------------------------------------------------------- #
# Host-side wrapper
# --------------------------------------------------------------------------- #
def dqm_forward(x, params, *, compute_dtype=jnp.bfloat16, block_batch=None,
                force_stream=None):
    """Fused MLP forward: pipelined batch grid, lane-dense outputs."""
    w_in, b_in, w_hid, b_hid, w_out, b_out = params
    batch, in_dim = x.shape
    hid_dim = w_in.shape[1]
    out_dim = w_out.shape[1]
    num_hidden_layers = w_hid.shape[0]
    cbytes = jnp.dtype(compute_dtype).itemsize

    # ---- generation-aware VMEM / tile caps ----------------------------------
    phys_vmem = _vmem_capacity_bytes()
    if phys_vmem <= (64 << 20):        # v7x: 64 MiB per TensorCore
        vmem_cap = 56 << 20            # leave headroom for internal scratch
        tb_cap = 256
    else:                              # v5e / v6e: 128 MiB
        vmem_cap = 100 << 20
        tb_cap = 512

    # ---- feature padding: only the lane (output) dim of a matmul needs 128 ---
    # in_dim is a pure contraction dim -> pad to the bf16 sublane quantum only.
    in_p = _round_up(max(in_dim, 1), _BF16_SUBLANE)
    hid_p = _round_up(hid_dim, _LANE)
    out_p = _round_up(out_dim, _LANE)

    # ---- batch tile: bf16-sublane multiple; >=2 tiles at batch>=64 (v7x TCs) -
    if block_batch is None:
        if batch >= 2 * tb_cap:
            block_batch = tb_cap
        elif batch >= 64:
            block_batch = min(tb_cap,
                              _round_up(pl.cdiv(batch, 2), _BF16_SUBLANE))
        else:
            block_batch = batch
    tb = _round_up(max(1, min(block_batch, batch)), _BF16_SUBLANE)
    batch_p = _round_up(batch, tb)
    n_tiles = batch_p // tb

    # ---- weight residency vs streaming decision ------------------------------
    resident_w_bytes = (in_p * hid_p + num_hidden_layers * hid_p * hid_p
                        + hid_p * out_p) * cbytes
    stream_hidden = (num_hidden_layers > 0
                     and resident_w_bytes > int(0.6 * vmem_cap))
    if force_stream is not None:
        stream_hidden = bool(force_stream) and num_hidden_layers > 0

    # ---- pad + cast operands once on the host --------------------------------
    def pad2(a, r, c):
        return jnp.pad(a, ((0, r - a.shape[0]), (0, c - a.shape[1])))

    x_p = pad2(x, batch_p, in_p).astype(compute_dtype)
    w_in_p = pad2(w_in, in_p, hid_p).astype(compute_dtype)
    b_in_p = pad2(b_in, 1, hid_p).astype(jnp.float32)
    w_out_p = pad2(w_out, hid_p, out_p).astype(compute_dtype)
    b_out_p = pad2(b_out, 1, out_p).astype(jnp.float32)

    if num_hidden_layers > 0:
        w_hid_p = jnp.pad(
            w_hid, ((0, 0), (0, hid_p - hid_dim), (0, hid_p - hid_dim))
        ).astype(compute_dtype)
        b_hid_p = jnp.pad(
            b_hid, ((0, 0), (0, 0), (0, hid_p - hid_dim))
        ).astype(jnp.float32)
        n_stack = num_hidden_layers
    else:
        # Tiny dummy stack (never read): keeps the operand list static without
        # DMA-ing / holding a full (hid_p, hid_p) placeholder.
        w_hid_p = jnp.zeros((1, _BF16_SUBLANE, _LANE), compute_dtype)
        b_hid_p = jnp.zeros((1, 1, _LANE), jnp.float32)
        n_stack = 1

    # ---- VMEM budget (Buffered(1) weights; ~15% headroom, no double hedge) ---
    if stream_hidden:
        w_vmem = (in_p * hid_p + hid_p * out_p) * cbytes          # resident, 1x
        w_vmem += 2 * (hid_p * hid_p * cbytes + hid_p * 4)        # streamed, 2x
        b_vmem = (hid_p + out_p) * 4
    else:
        w_vmem = resident_w_bytes if num_hidden_layers > 0 else (
            (in_p * hid_p + hid_p * out_p) * cbytes
            + w_hid_p.size * cbytes)
        b_vmem = (hid_p + n_stack * hid_p + out_p) * 4
    est = (w_vmem + b_vmem
           + 2 * tb * in_p * cbytes       # double-buffered x tile
           + 2 * tb * out_p * 4           # double-buffered out tile
           + tb * hid_p * cbytes          # bf16 activation
           + tb * hid_p * 4)              # f32 matmul accumulator
    vmem_limit = int(min(max(int(est * 1.15), 32 << 20), vmem_cap))

    flops = 2 * batch_p * (in_p * hid_p + num_hidden_layers * hid_p * hid_p
                           + hid_p * out_p)
    bytes_accessed = (batch_p * in_p * cbytes + batch_p * out_p * 4
                      + resident_w_bytes + b_vmem)
    cost = pl.CostEstimate(flops=flops, transcendentals=0,
                           bytes_accessed=int(bytes_accessed))

    def build_call(weight_mode):
        wkw = {} if weight_mode is None else {"pipeline_mode": weight_mode}

        if not stream_hidden:
            kernel = functools.partial(_mlp_resident_kernel,
                                       num_hidden_layers=num_hidden_layers)
            grid = (n_tiles,)
            c2 = lambda i: (0, 0)
            c3 = lambda i: (0, 0, 0)
            in_specs = [
                pl.BlockSpec((tb, in_p), lambda i: (i, 0)),         # x: batch-tiled
                pl.BlockSpec((in_p, hid_p), c2, **wkw),             # resident weights
                pl.BlockSpec((1, hid_p), c2, **wkw),
                pl.BlockSpec(w_hid_p.shape, c3, **wkw),
                pl.BlockSpec(b_hid_p.shape, c3, **wkw),
                pl.BlockSpec((hid_p, out_p), c2, **wkw),
                pl.BlockSpec((1, out_p), c2, **wkw),
            ]
            out_specs = pl.BlockSpec((tb, out_p), lambda i: (i, 0))
            scratch = []
            dims = ("parallel",)
        else:
            kernel = _mlp_streaming_kernel
            grid = (n_tiles, num_hidden_layers)
            c2 = lambda i, l: (0, 0)
            in_specs = [
                pl.BlockSpec((tb, in_p), lambda i, l: (i, 0)),
                pl.BlockSpec((in_p, hid_p), c2, **wkw),
                pl.BlockSpec((1, hid_p), c2, **wkw),
                pl.BlockSpec((1, hid_p, hid_p), lambda i, l: (l, 0, 0)),
                pl.BlockSpec((1, 1, hid_p), lambda i, l: (l, 0, 0)),
                pl.BlockSpec((hid_p, out_p), c2, **wkw),
                pl.BlockSpec((1, out_p), c2, **wkw),
            ]
            out_specs = pl.BlockSpec((tb, out_p), lambda i, l: (i, 0))
            scratch = [pltpu.VMEM((tb, hid_p), compute_dtype)]
            dims = ("parallel", "arbitrary")

        return pl.pallas_call(
            kernel,
            out_shape=jax.ShapeDtypeStruct((batch_p, out_p), jnp.float32),
            grid=grid,
            in_specs=in_specs,
            out_specs=out_specs,
            scratch_shapes=scratch,
            cost_estimate=cost,
            compiler_params=pltpu.CompilerParams(
                dimension_semantics=dims,
                vmem_limit_bytes=vmem_limit,
            ),
        )

    args = (x_p, w_in_p, b_in_p, w_hid_p, b_hid_p, w_out_p, b_out_p)
    try:
        out_padded = build_call(pl.Buffered(1))(*args)
    except Exception:
        # Fallback if this jax build rejects single-buffered grid-invariant specs.
        out_padded = build_call(None)(*args)

    return out_padded[:batch, :out_dim]


# --------------------------------------------------------------------------- #
# Parameters / reference
# --------------------------------------------------------------------------- #
def init_params(key, input_dim, hidden_dim, output_dim, depth):
    """Deterministic synthetic parameters matching the PyTorch module shapes."""
    ks = jax.random.split(key, 6)
    num_hidden_layers = depth - 1  # len(self.hidden_layers)

    def uniform(k, shape, fan_in):
        bound = 1.0 / jnp.sqrt(jnp.float32(fan_in))
        return jax.random.uniform(k, shape, jnp.float32, -bound, bound)

    # Stored as [in, out] (transposed relative to torch.nn.Linear.weight)
    w_in = uniform(ks[0], (input_dim, hidden_dim), input_dim)
    b_in = uniform(ks[1], (1, hidden_dim), input_dim)
    w_hid = uniform(ks[2], (num_hidden_layers, hidden_dim, hidden_dim), hidden_dim)
    b_hid = uniform(ks[3], (num_hidden_layers, 1, hidden_dim), hidden_dim)
    w_out = uniform(ks[4], (hidden_dim, output_dim), hidden_dim)
    b_out = uniform(ks[5], (1, output_dim), hidden_dim)
    return w_in, b_in, w_hid, b_hid, w_out, b_out


def dqm_reference(x, params, compute_dtype=jnp.float32):
    """Pure-JAX reference of the same forward pass (optionally bf16 matmuls)."""
    w_in, b_in, w_hid, b_hid, w_out, b_out = params
    cd = compute_dtype
    h = jnp.dot(x.astype(cd), w_in.astype(cd),
                preferred_element_type=jnp.float32) + b_in
    h = jnp.maximum(h, 0.0)
    for l in range(w_hid.shape[0]):
        h = jnp.dot(h.astype(cd), w_hid[l].astype(cd),
                    preferred_element_type=jnp.float32) + b_hid[l]
        h = jnp.maximum(h, 0.0)
    return jnp.dot(h.astype(cd), w_out.astype(cd),
                   preferred_element_type=jnp.float32) + b_out


if __name__ == "__main__":
    key = jax.random.PRNGKey(0)
    k_x, k_p, k_p1 = jax.random.split(key, 3)

    # Small shapes consistent with the module: depth=3 -> 2 hidden layers.
    input_dim, hidden_dim, output_dim, depth = 8, 32, 4, 3
    batch = 32
    x = jax.random.normal(k_x, (batch, input_dim), jnp.float32)
    params = init_params(k_p, input_dim, hidden_dim, output_dim, depth)

    out = dqm_forward(x, params)  # resident-weight path (default)
    jax.block_until_ready(out)
    assert out.shape == (batch, output_dim)

    ref_bf16 = dqm_reference(x, params, compute_dtype=jnp.bfloat16)
    ref_f32 = dqm_reference(x, params, compute_dtype=jnp.float32)
    assert jnp.allclose(out, ref_bf16, atol=2e-3, rtol=2e-3), "mismatch vs bf16 ref"
    assert jnp.allclose(out, ref_f32, atol=5e-2, rtol=5e-2), "mismatch vs f32 ref"

    # Exercise the weight-streaming path (layer grid axis) on the same model.
    out_s = dqm_forward(x, params, force_stream=True)
    jax.block_until_ready(out_s)
    assert jnp.allclose(out_s, ref_bf16, atol=2e-3, rtol=2e-3), "streaming mismatch"

    # depth=1 (no hidden layers) exercises the tiny dummy-operand path.
    params1 = init_params(k_p1, input_dim, hidden_dim, output_dim, 1)
    out1 = dqm_forward(x, params1)
    jax.block_until_ready(out1)
    assert jnp.allclose(out1, dqm_reference(x, params1, jnp.bfloat16),
                        atol=2e-3, rtol=2e-3), "depth-1 mismatch"

    print("KERNEL_OK")
</pallas_src>

<mosaic_0001>
module attributes {stable_mosaic.version = 11 : i64} {
  func.func @_mlp_resident_kernel(%arg0: i32, %arg1: memref<32x16xbf16, #tpu.memory_space<vmem>>, %arg2: memref<16x128xbf16, #tpu.memory_space<vmem>>, %arg3: memref<1x128xf32, #tpu.memory_space<vmem>>, %arg4: memref<2x128x128xbf16, #tpu.memory_space<vmem>>, %arg5: memref<2x1x128xf32, #tpu.memory_space<vmem>>, %arg6: memref<128x128xbf16, #tpu.memory_space<vmem>>, %arg7: memref<1x128xf32, #tpu.memory_space<vmem>>, %arg8: memref<32x128xf32, #tpu.memory_space<vmem>>) attributes {dimension_semantics = [#tpu.dimension_semantics<parallel>], iteration_bounds = array<i64: 1>, scalar_prefetch = 0 : i64, scratch_operands = 0 : i64, tpu.core_type = #tpu.core_type<tc>, window_params = [{transform_indices = @transform_0, window_bounds = array<i64: 32, 16>}, {pipeline_mode = #tpu.pipeline_mode<synchronous>, transform_indices = @transform_1, window_bounds = array<i64: 16, 128>}, {pipeline_mode = #tpu.pipeline_mode<synchronous>, transform_indices = @transform_2, window_bounds = array<i64: 1, 128>}, {pipeline_mode = #tpu.pipeline_mode<synchronous>, transform_indices = @transform_3, window_bounds = array<i64: 2, 128, 128>}, {pipeline_mode = #tpu.pipeline_mode<synchronous>, transform_indices = @transform_4, window_bounds = array<i64: 2, 1, 128>}, {pipeline_mode = #tpu.pipeline_mode<synchronous>, transform_indices = @transform_5, window_bounds = array<i64: 128, 128>}, {pipeline_mode = #tpu.pipeline_mode<synchronous>, transform_indices = @transform_6, window_bounds = array<i64: 1, 128>}, {transform_indices = @transform_7, window_bounds = array<i64: 32, 128>}]} {
    %c0 = arith.constant 0 : index
    %c0_0 = arith.constant 0 : index
    %0 = vector.load %arg1[%c0, %c0_0] : memref<32x16xbf16, #tpu.memory_space<vmem>>, vector<32x16xbf16>
    %c0_1 = arith.constant 0 : index
    %c0_2 = arith.constant 0 : index
    %1 = vector.load %arg2[%c0_1, %c0_2] : memref<16x128xbf16, #tpu.memory_space<vmem>>, vector<16x128xbf16>
    %cst = arith.constant dense<0.000000e+00> : vector<32x128xf32>
    %2 = tpu.matmul %0, %1, %cst {dimension_numbers = #tpu.dot_dimension_numbers<[1], [0], [0], [1], [0, 0, 1, 1], [], []>} : vector<32x16xbf16>, vector<16x128xbf16>, vector<32x128xf32> -> vector<32x128xf32>
    %c0_3 = arith.constant 0 : index
    %c0_4 = arith.constant 0 : index
    %3 = vector.load %arg3[%c0_3, %c0_4] : memref<1x128xf32, #tpu.memory_space<vmem>>, vector<1x128xf32>
    %4 = vector.broadcast %3 : vector<1x128xf32> to vector<32x128xf32>
    %5 = arith.addf %2, %4 : vector<32x128xf32>
    %cst_5 = arith.constant 0.000000e+00 : f32
    %6 = vector.broadcast %cst_5 : f32 to vector<32x128xf32>
    %7 = arith.maximumf %5, %6 : vector<32x128xf32>
    %8 = arith.truncf %7 : vector<32x128xf32> to vector<32x128xbf16>
    %c0_6 = arith.constant 0 : index
    %c0_7 = arith.constant 0 : index
    %c0_8 = arith.constant 0 : index
    %9 = vector.load %arg4[%c0_6, %c0_7, %c0_8] : memref<2x128x128xbf16, #tpu.memory_space<vmem>>, vector<1x128x128xbf16>
    %10 = vector.shape_cast %9 : vector<1x128x128xbf16> to vector<128x128xbf16>
    %cst_9 = arith.constant dense<0.000000e+00> : vector<32x128xf32>
    %11 = tpu.matmul %8, %10, %cst_9 {dimension_numbers = #tpu.dot_dimension_numbers<[1], [0], [0], [1], [0, 0, 1, 1], [], []>} : vector<32x128xbf16>, vector<128x128xbf16>, vector<32x128xf32> -> vector<32x128xf32>
    %c0_10 = arith.constant 0 : index
    %c0_11 = arith.constant 0 : index
    %c0_12 = arith.constant 0 : index
    %12 = vector.load %arg5[%c0_10, %c0_11, %c0_12] : memref<2x1x128xf32, #tpu.memory_space<vmem>>, vector<1x1x128xf32>
    %13 = vector.shape_cast %12 : vector<1x1x128xf32> to vector<1x128xf32>
    %14 = vector.broadcast %13 : vector<1x128xf32> to vector<32x128xf32>
    %15 = arith.addf %11, %14 : vector<32x128xf32>
    %cst_13 = arith.constant 0.000000e+00 : f32
    %16 = vector.broadcast %cst_13 : f32 to vector<32x128xf32>
    %17 = arith.maximumf %15, %16 : vector<32x128xf32>
    %18 = arith.truncf %17 : vector<32x128xf32> to vector<32x128xbf16>
    %c1 = arith.constant 1 : index
    %c0_14 = arith.constant 0 : index
    %c0_15 = arith.constant 0 : index
    %19 = vector.load %arg4[%c1, %c0_14, %c0_15] : memref<2x128x128xbf16, #tpu.memory_space<vmem>>, vector<1x128x128xbf16>
    %20 = vector.shape_cast %19 : vector<1x128x128xbf16> to vector<128x128xbf16>
    %cst_16 = arith.constant dense<0.000000e+00> : vector<32x128xf32>
    %21 = tpu.matmul %18, %20, %cst_16 {dimension_numbers = #tpu.dot_dimension_numbers<[1], [0], [0], [1], [0, 0, 1, 1], [], []>} : vector<32x128xbf16>, vector<128x128xbf16>, vector<32x128xf32> -> vector<32x128xf32>
    %c1_17 = arith.constant 1 : index
    %c0_18 = arith.constant 0 : index
    %c0_19 = arith.constant 0 : index
    %22 = vector.load %arg5[%c1_17, %c0_18, %c0_19] : memref<2x1x128xf32, #tpu.memory_space<vmem>>, vector<1x1x128xf32>
    %23 = vector.shape_cast %22 : vector<1x1x128xf32> to vector<1x128xf32>
    %24 = vector.broadcast %23 : vector<1x128xf32> to vector<32x128xf32>
    %25 = arith.addf %21, %24 : vector<32x128xf32>
    %cst_20 = arith.constant 0.000000e+00 : f32
    %26 = vector.broadcast %cst_20 : f32 to vector<32x128xf32>
    %27 = arith.maximumf %25, %26 : vector<32x128xf32>
    %28 = arith.truncf %27 : vector<32x128xf32> to vector<32x128xbf16>
    %c0_21 = arith.constant 0 : index
    %c0_22 = arith.constant 0 : index
    %29 = vector.load %arg6[%c0_21, %c0_22] : memref<128x128xbf16, #tpu.memory_space<vmem>>, vector<128x128xbf16>
    %cst_23 = arith.constant dense<0.000000e+00> : vector<32x128xf32>
    %30 = tpu.matmul %28, %29, %cst_23 {dimension_numbers = #tpu.dot_dimension_numbers<[1], [0], [0], [1], [0, 0, 1, 1], [], []>} : vector<32x128xbf16>, vector<128x128xbf16>, vector<32x128xf32> -> vector<32x128xf32>
    %c0_24 = arith.constant 0 : index
    %c0_25 = arith.constant 0 : index
    %31 = vector.load %arg7[%c0_24, %c0_25] : memref<1x128xf32, #tpu.memory_space<vmem>>, vector<1x128xf32>
    %32 = vector.broadcast %31 : vector<1x128xf32> to vector<32x128xf32>
    %33 = arith.addf %30, %32 : vector<32x128xf32>
    %c0_26 = arith.constant 0 : index
    %c0_27 = arith.constant 0 : index
    %34 = vector.load %arg8[%c0_26, %c0_27] : memref<32x128xf32, #tpu.memory_space<vmem>>, vector<32x128xf32>
    tpu.vector_store %arg8[%c0_26, %c0_27], %33 {strides = array<i32>} : memref<32x128xf32, #tpu.memory_space<vmem>>, vector<32x128xf32>,
    return
  }
  func.func @transform_0(%arg0: i32) -> (i32, i32) {
    %c0_i32 = arith.constant 0 : i32
    %c0_i32_0 = arith.constant 0 : i32
    return %arg0, %c0_i32 : i32, i32
  }
  func.func @transform_1(%arg0: i32) -> (i32, i32) {
    %c0_i32 = arith.constant 0 : i32
    %c0_i32_0 = arith.constant 0 : i32
    %c0_i32_1 = arith.constant 0 : i32
    return %c0_i32, %c0_i32_0 : i32, i32
  }
  func.func @transform_2(%arg0: i32) -> (i32, i32) {
    %c0_i32 = arith.constant 0 : i32
    %c0_i32_0 = arith.constant 0 : i32
    %c0_i32_1 = arith.constant 0 : i32
    return %c0_i32, %c0_i32_0 : i32, i32
  }
  func.func @transform_3(%arg0: i32) -> (i32, i32, i32) {
    %c0_i32 = arith.constant 0 : i32
    %c0_i32_0 = arith.constant 0 : i32
    %c0_i32_1 = arith.constant 0 : i32
    %c0_i32_2 = arith.constant 0 : i32
    return %c0_i32, %c0_i32_0, %c0_i32_1 : i32, i32, i32
  }
  func.func @transform_4(%arg0: i32) -> (i32, i32, i32) {
    %c0_i32 = arith.constant 0 : i32
    %c0_i32_0 = arith.constant 0 : i32
    %c0_i32_1 = arith.constant 0 : i32
    %c0_i32_2 = arith.constant 0 : i32
    return %c0_i32, %c0_i32_0, %c0_i32_1 : i32, i32, i32
  }
  func.func @transform_5(%arg0: i32) -> (i32, i32) {
    %c0_i32 = arith.constant 0 : i32
    %c0_i32_0 = arith.constant 0 : i32
    %c0_i32_1 = arith.constant 0 : i32
    return %c0_i32, %c0_i32_0 : i32, i32
  }
  func.func @transform_6(%arg0: i32) -> (i32, i32) {
    %c0_i32 = arith.constant 0 : i32
    %c0_i32_0 = arith.constant 0 : i32
    %c0_i32_1 = arith.constant 0 : i32
    return %c0_i32, %c0_i32_0 : i32, i32
  }
  func.func @transform_7(%arg0: i32) -> (i32, i32) {
    %c0_i32 = arith.constant 0 : i32
    %c0_i32_0 = arith.constant 0 : i32
    return %arg0, %c0_i32 : i32, i32
  }
}

module attributes {stable_mosaic.version = 11 : i64} {
  func.func @_mlp_resident_kernel(%arg0: i32, %arg1: memref<32x16xbf16, #tpu.memory_space<vmem>>, %arg2: memref<16x128xbf16, #tpu.memory_space<vmem>>, %arg3: memref<1x128xf32, #tpu.memory_space<vmem>>, %arg4: memref<2x128x128xbf16, #tpu.memory_space<vmem>>, %arg5: memref<2x1x128xf32, #tpu.memory_space<vmem>>, %arg6: memref<128x128xbf16, #tpu.memory_space<vmem>>, %arg7: memref<1x128xf32, #tpu.memory_space<vmem>>, %arg8: memref<32x128xf32, #tpu.memory_space<vmem>>) attributes {dimension_semantics = [#tpu.dimension_semantics<parallel>], iteration_bounds = array<i64: 1>, scalar_prefetch = 0 : i64, scratch_operands = 0 : i64, tpu.core_type = #tpu.core_type<tc>, window_params = [{transform_indices = @transform_0, window_bounds = array<i64: 32, 16>}, {pipeline_mode = #tpu.pipeline_mode<synchronous>, transform_indices = @transform_1, window_bounds = array<i64: 16, 128>}, {pipeline_mode = #tpu.pipeline_mode<synchronous>, transform_indices = @transform_2, window_bounds = array<i64: 1, 128>}, {pipeline_mode = #tpu.pipeline_mode<synchronous>, transform_indices = @transform_3, window_bounds = array<i64: 2, 128, 128>}, {pipeline_mode = #tpu.pipeline_mode<synchronous>, transform_indices = @transform_4, window_bounds = array<i64: 2, 1, 128>}, {pipeline_mode = #tpu.pipeline_mode<synchronous>, transform_indices = @transform_5, window_bounds = array<i64: 128, 128>}, {pipeline_mode = #tpu.pipeline_mode<synchronous>, transform_indices = @transform_6, window_bounds = array<i64: 1, 128>}, {transform_indices = @transform_7, window_bounds = array<i64: 32, 128>}]} {
    %c0 = arith.constant 0 : index
    %c0_0 = arith.constant 0 : index
    %0 = vector.load %arg1[%c0, %c0_0] : memref<32x16xbf16, #tpu.memory_space<vmem>>, vector<32x16xbf16>
    %c0_1 = arith.constant 0 : index
    %c0_2 = arith.constant 0 : index
    %1 = vector.load %arg2[%c0_1, %c0_2] : memref<16x128xbf16, #tpu.memory_space<vmem>>, vector<16x128xbf16>
    %cst = arith.constant dense<0.000000e+00> : vector<32x128xf32>
    %2 = tpu.matmul %0, %1, %cst {dimension_numbers = #tpu.dot_dimension_numbers<[1], [0], [0], [1], [0, 0, 1, 1], [], []>} : vector<32x16xbf16>, vector<16x128xbf16>, vector<32x128xf32> -> vector<32x128xf32>
    %c0_3 = arith.constant 0 : index
    %c0_4 = arith.constant 0 : index
    %3 = vector.load %arg3[%c0_3, %c0_4] : memref<1x128xf32, #tpu.memory_space<vmem>>, vector<1x128xf32>
    %4 = vector.broadcast %3 : vector<1x128xf32> to vector<32x128xf32>
    %5 = arith.addf %2, %4 : vector<32x128xf32>
    %cst_5 = arith.constant 0.000000e+00 : f32
    %6 = vector.broadcast %cst_5 : f32 to vector<32x128xf32>
    %7 = arith.maximumf %5, %6 : vector<32x128xf32>
    %8 = arith.truncf %7 : vector<32x128xf32> to vector<32x128xbf16>
    %c0_6 = arith.constant 0 : index
    %c0_7 = arith.constant 0 : index
    %c0_8 = arith.constant 0 : index
    %9 = vector.load %arg4[%c0_6, %c0_7, %c0_8] : memref<2x128x128xbf16, #tpu.memory_space<vmem>>, vector<1x128x128xbf16>
    %10 = vector.shape_cast %9 : vector<1x128x128xbf16> to vector<128x128xbf16>
    %cst_9 = arith.constant dense<0.000000e+00> : vector<32x128xf32>
    %11 = tpu.matmul %8, %10, %cst_9 {dimension_numbers = #tpu.dot_dimension_numbers<[1], [0], [0], [1], [0, 0, 1, 1], [], []>} : vector<32x128xbf16>, vector<128x128xbf16>, vector<32x128xf32> -> vector<32x128xf32>
    %c0_10 = arith.constant 0 : index
    %c0_11 = arith.constant 0 : index
    %c0_12 = arith.constant 0 : index
    %12 = vector.load %arg5[%c0_10, %c0_11, %c0_12] : memref<2x1x128xf32, #tpu.memory_space<vmem>>, vector<1x1x128xf32>
    %13 = vector.shape_cast %12 : vector<1x1x128xf32> to vector<1x128xf32>
    %14 = vector.broadcast %13 : vector<1x128xf32> to vector<32x128xf32>
    %15 = arith.addf %11, %14 : vector<32x128xf32>
    %cst_13 = arith.constant 0.000000e+00 : f32
    %16 = vector.broadcast %cst_13 : f32 to vector<32x128xf32>
    %17 = arith.maximumf %15, %16 : vector<32x128xf32>
    %18 = arith.truncf %17 : vector<32x128xf32> to vector<32x128xbf16>
    %c1 = arith.constant 1 : index
    %c0_14 = arith.constant 0 : index
    %c0_15 = arith.constant 0 : index
    %19 = vector.load %arg4[%c1, %c0_14, %c0_15] : memref<2x128x128xbf16, #tpu.memory_space<vmem>>, vector<1x128x128xbf16>
    %20 = vector.shape_cast %19 : vector<1x128x128xbf16> to vector<128x128xbf16>
    %cst_16 = arith.constant dense<0.000000e+00> : vector<32x128xf32>
    %21 = tpu.matmul %18, %20, %cst_16 {dimension_numbers = #tpu.dot_dimension_numbers<[1], [0], [0], [1], [0, 0, 1, 1], [], []>} : vector<32x128xbf16>, vector<128x128xbf16>, vector<32x128xf32> -> vector<32x128xf32>
    %c1_17 = arith.constant 1 : index
    %c0_18 = arith.constant 0 : index
    %c0_19 = arith.constant 0 : index
    %22 = vector.load %arg5[%c1_17, %c0_18, %c0_19] : memref<2x1x128xf32, #tpu.memory_space<vmem>>, vector<1x1x128xf32>
    %23 = vector.shape_cast %22 : vector<1x1x128xf32> to vector<1x128xf32>
    %24 = vector.broadcast %23 : vector<1x128xf32> to vector<32x128xf32>
    %25 = arith.addf %21, %24 : vector<32x128xf32>
    %cst_20 = arith.constant 0.000000e+00 : f32
    %26 = vector.broadcast %cst_20 : f32 to vector<32x128xf32>
    %27 = arith.maximumf %25, %26 : vector<32x128xf32>
    %28 = arith.truncf %27 : vector<32x128xf32> to vector<32x128xbf16>
    %c0_21 = arith.constant 0 : index
    %c0_22 = arith.constant 0 : index
    %29 = vector.load %arg6[%c0_21, %c0_22] : memref<128x128xbf16, #tpu.memory_space<vmem>>, vector<128x128xbf16>
    %cst_23 = arith.constant dense<0.000000e+00> : vector<32x128xf32>
    %30 = tpu.matmul %28, %29, %cst_23 {dimension_numbers = #tpu.dot_dimension_numbers<[1], [0], [0], [1], [0, 0, 1, 1], [], []>} : vector<32x128xbf16>, vector<128x128xbf16>, vector<32x128xf32> -> vector<32x128xf32>
    %c0_24 = arith.constant 0 : index
    %c0_25 = arith.constant 0 : index
    %31 = vector.load %arg7[%c0_24, %c0_25] : memref<1x128xf32, #tpu.memory_space<vmem>>, vector<1x128xf32>
    %32 = vector.broadcast %31 : vector<1x128xf32> to vector<32x128xf32>
    %33 = arith.addf %30, %32 : vector<32x128xf32>
    %c0_26 = arith.constant 0 : index
    %c0_27 = arith.constant 0 : index
    %34 = vector.load %arg8[%c0_26, %c0_27] : memref<32x128xf32, #tpu.memory_space<vmem>>, vector<32x128xf32>
    tpu.vector_store %arg8[%c0_26, %c0_27], %33 {strides = array<i32>} : memref<32x128xf32, #tpu.memory_space<vmem>>, vector<32x128xf32>,
    return
  }
  func.func @transform_0(%arg0: i32) -> (i32, i32) {
    %c0_i32 = arith.constant 0 : i32
    %c0_i32_0 = arith.constant 0 : i32
    return %arg0, %c0_i32 : i32, i32
  }
  func.func @transform_1(%arg0: i32) -> (i32, i32) {
    %c0_i32 = arith.constant 0 : i32
    %c0_i32_0 = arith.constant 0 : i32
    %c0_i32_1 = arith.constant 0 : i32
    return %c0_i32, %c0_i32_0 : i32, i32
  }
  func.func @transform_2(%arg0: i32) -> (i32, i32) {
    %c0_i32 = arith.constant 0 : i32
    %c0_i32_0 = arith.constant 0 : i32
    %c0_i32_1 = arith.constant 0 : i32
    return %c0_i32, %c0_i32_0 : i32, i32
  }
  func.func @transform_3(%arg0: i32) -> (i32, i32, i32) {
    %c0_i32 = arith.constant 0 : i32
    %c0_i32_0 = arith.constant 0 : i32
    %c0_i32_1 = arith.constant 0 : i32
    %c0_i32_2 = arith.constant 0 : i32
    return %c0_i32, %c0_i32_0, %c0_i32_1 : i32, i32, i32
  }
  func.func @transform_4(%arg0: i32) -> (i32, i32, i32) {
    %c0_i32 = arith.constant 0 : i32
    %c0_i32_0 = arith.constant 0 : i32
    %c0_i32_1 = arith.constant 0 : i32
    %c0_i32_2 = arith.constant 0 : i32
    return %c0_i32, %c0_i32_0, %c0_i32_1 : i32, i32, i32
  }
  func.func @transform_5(%arg0: i32) -> (i32, i32) {
    %c0_i32 = arith.constant 0 : i32
    %c0_i32_0 = arith.constant 0 : i32
    %c0_i32_1 = arith.constant 0 : i32
    return %c0_i32, %c0_i32_0 : i32, i32
  }
  func.func @transform_6(%arg0: i32) -> (i32, i32) {
    %c0_i32 = arith.constant 0 : i32
    %c0_i32_0 = arith.constant 0 : i32
    %c0_i32_1 = arith.constant 0 : i32
    return %c0_i32, %c0_i32_0 : i32, i32
  }
  func.func @transform_7(%arg0: i32) -> (i32, i32) {
    %c0_i32 = arith.constant 0 : i32
    %c0_i32_0 = arith.constant 0 : i32
    return %arg0, %c0_i32 : i32, i32
  }
}

</mosaic_0001>

<llo_original>
// kernel: tpu_custom_call.1
$region0: #{tpu_custom_call.1}
  #allocation0 [shape = 'u32[]', space=smem, size = 0x4, offset = 0x4, fixed_abs, tag = 'smem constant byte address 0x4 - core index']
  #allocation1 [shape = 'u32[144,128]{1,0:T(1,128)}', space=vmem, size = 0x12000, scoped, tag = 'internal scratch']
  %s0 = inlined_call_operand.vmem [shape: bf16[32,16], index: 0, kind: input, shape index: {}]
  %s1 = inlined_call_operand.vmem [shape: bf16[16,128], index: 1, kind: input, shape index: {}]
  %s2 = inlined_call_operand.vmem [shape: f32[1,128], index: 2, kind: input, shape index: {}]
  %s3 = inlined_call_operand.hbm [shape: bf16[2,128,128], index: 3, kind: input, shape index: {}]
  %s4 = inlined_call_operand.vmem [shape: f32[2,1,128], index: 4, kind: input, shape index: {}]
  %s5 = inlined_call_operand.hbm [shape: bf16[128,128], index: 5, kind: input, shape index: {}]
  %s6 = inlined_call_operand.vmem [shape: f32[1,128], index: 6, kind: input, shape index: {}]
  %s7 = inlined_call_operand.hbm [shape: f32[32,128], index: 7, kind: output, shape index: {}]
  %s8 = sld [smem:[#allocation0]]
  $region46: #{tpu_custom_call.1} parent=0
    _
  %s10 = ssub.s32 1, %s8
  %s11 = scalar_select 0, %s10, %s8
  $region1: #{tpu_custom_call.1} parent=0
    #allocation2 [shape = 'u8[65536]{0}', space=vmem, size = 0x10000, scoped, tag = 'input window, operand 3, single buffered']
    #allocation3 [shape = 's32[1]{0}', space=sflag, size = 0x4, scoped, tag = 'scoped memory for tpu_custom_call.1']
    #allocation4 [shape = 's32[1]{0}', space=sflag, size = 0x4, scoped, tag = 'scoped memory for tpu_custom_call.1']
    #allocation5 [shape = 'u8[32768]{0}', space=vmem, size = 0x8000, scoped, tag = 'input window, operand 5, single buffered']
    #allocation6 [shape = 's32[1]{0}', space=sflag, size = 0x4, scoped, tag = 'scoped memory for tpu_custom_call.1']
    #allocation7 [shape = 'u8[16384]{0}', space=vmem, size = 0x4000, scoped, tag = 'output window, operand 0, single buffered']
    %12 = vsyncpa [#allocation3], 0
    %13 = vsyncpa [#allocation6], 0
    %14 = vsyncpa [#allocation4], 0
    // Predicated region
    $region2: #{tpu_custom_call.1} parent=1 // pred_check
      _
    $region3: #{tpu_custom_call.1} parent=1 // pred_check_branch
      %16 = sbr.rel (0) target = $region5
    $region4: #{tpu_custom_call.1} parent=1 // pred_region
      _
    $region5: #{tpu_custom_call.1} parent=1 // pred_fallthru
      _
    // Predicated region
    $region6: #{tpu_custom_call.1} parent=1 // pred_check
      _
    $region7: #{tpu_custom_call.1} parent=1 // pred_check_branch
      %18 = sbr.rel (0) target = $region9
    $region8: #{tpu_custom_call.1} parent=1 // pred_region
      _
    $region9: #{tpu_custom_call.1} parent=1 // pred_fallthru
      _
    // Predicated region
    $region10: #{tpu_custom_call.1} parent=1 // pred_check
      _
    $region11: #{tpu_custom_call.1} parent=1 // pred_check_branch
      %20 = sbr.rel (0) target = $region13
    $region12: #{tpu_custom_call.1} parent=1 // pred_region
      _
    $region13: #{tpu_custom_call.1} parent=1 // pred_fallthru
      _
    // Predicated region
    $region14: #{tpu_custom_call.1} parent=1 // pred_check
      _
    $region15: #{tpu_custom_call.1} parent=1 // pred_check_branch
      %22 = sbr.rel (0) target = $region17
    $region16: #{tpu_custom_call.1} parent=1 // pred_region
      %s24 = ssub.s32 2048, 2048
      %25 = vsyncadd [#allocation3], %s24
      %s26 = sshll.u32 [#allocation2], 4
      %s27 = int_to_ptr.vmem [resolvable:$true] %s26
      %32 = dma.hbm_to_vmem [thread:$0]  %s3, 2048, %s27, [#allocation3], 64, 64, 4
    $region17: #{tpu_custom_call.1} parent=1 // pred_fallthru
      _
    // Predicated region
    $region18: #{tpu_custom_call.1} parent=1 // pred_check
      _
    $region19: #{tpu_custom_call.1} parent=1 // pred_check_branch
      %34 = sbr.rel (0) target = $region21
    $region20: #{tpu_custom_call.1} parent=1 // pred_region
      _
    $region21: #{tpu_custom_call.1} parent=1 // pred_fallthru
      _
    // Predicated region
    $region22: #{tpu_custom_call.1} parent=1 // pred_check
      _
    $region23: #{tpu_custom_call.1} parent=1 // pred_check_branch
      %36 = sbr.rel (0) target = $region25
    $region24: #{tpu_custom_call.1} parent=1 // pred_region
      %s38 = ssub.s32 1024, 1024
      %39 = vsyncadd [#allocation6], %s38
      %s40 = sshll.u32 [#allocation5], 4
      %s41 = int_to_ptr.vmem [resolvable:$true] %s40
      %46 = dma.hbm_to_vmem [thread:$0]  %s5, 1024, %s41, [#allocation6], 64, 64, 4
    $region25: #{tpu_custom_call.1} parent=1 // pred_fallthru
      _
    // Predicated region
    $region26: #{tpu_custom_call.1} parent=1 // pred_check
      _
    $region27: #{tpu_custom_call.1} parent=1 // pred_check_branch
      %48 = sbr.rel (0) target = $region29
    $region28: #{tpu_custom_call.1} parent=1 // pred_region
      _
    $region29: #{tpu_custom_call.1} parent=1 // pred_fallthru
      _
    // Predicated region
    $region30: #{tpu_custom_call.1} parent=1 // pred_check
      _
    $region31: #{tpu_custom_call.1} parent=1 // pred_check_branch
      %50 = sbr.rel (0) target = $region33
    $region32: #{tpu_custom_call.1} parent=1 // pred_region
      %51 = dma.done [#allocation3], 2048
    $region33: #{tpu_custom_call.1} parent=1 // pred_fallthru
      _
    // Predicated region
    $region34: #{tpu_custom_call.1} parent=1 // pred_check
      _
    $region35: #{tpu_custom_call.1} parent=1 // pred_check_branch
      %53 = sbr.rel (0) target = $region37
    $region36: #{tpu_custom_call.1} parent=1 // pred_region
      %54 = dma.done [#allocation6], 1024
    $region37: #{tpu_custom_call.1} parent=1 // pred_fallthru
      _
    %v56 = vld [vmem:[%s0] sm:$0xf]
    %v57 = vld [vmem:[%s0 + $0x4] sm:$0xf]
    %v58 = vld [vmem:[%s0 + $0x8] sm:$0xf]
    %v59 = vld [vmem:[%s0 + $0xc] sm:$0xf]
    %v60 = vld [vmem:[%s1] sm:$0xf]
    %v61 = vld [vmem:[%s1 + $0x4] sm:$0xf]
    %v62 = vld [vmem:[%s2] sm:$0x1]
    %v64 = vlaneseq
    %v65 = vshrl.u32 %v64, 7
    %v66 = vsub.s32 0, %v65
    %v67 = vrot.slane %v62, %v66
    %v73 = vunpack.c.l.b16 %v56
    %v74 = vunpack.c.l.b16 %v57
    %v75 = vunpack.c.l.b16 %v58
    %v76 = vunpack.c.l.b16 %v59
    %v77 = vpack.c.b16 %v74, %v73
    %v78 = vpack.c.b16 %v76, %v75
    %v81 = vunpack.c.l.b16 %v60
    %v82 = vunpack.c.l.b16 %v61
    %v83 = vpack.c.b16 %v82, %v81
    %vm85 = vcmask 130048
    %v87 = vsel %vm85, %v77, 0
    %v90 = vsel %vm85, %v78, 0
    %92 = vmatprep.subr.bf16.mxu0 0
    %93 = vmatpush1.bf16.msra.mxu0 %v83
    %94 = vmatprep.subr.bf16.mxu0 0
    %95 = vmatpush1.bf16.msra.mxu0 0
    %96 = vmatprep.subr.bf16.mxu0 0
    %97 = vmatpush1.bf16.msra.mxu0 0
    %98 = vmatprep.subr.bf16.mxu0 0
    %99 = vmatpush1.bf16.msra.mxu0 0
    %100 = vmatprep.subr.bf16.mxu0 0
    %101 = vmatpush1.bf16.msra.mxu0 0
    %102 = vmatprep.subr.bf16.mxu0 0
    %103 = vmatpush1.bf16.msra.mxu0 0
    %104 = vmatprep.subr.bf16.mxu0 0
    %105 = vmatpush1.bf16.msra.mxu0 0
    %106 = vmatprep.subr.bf16.mxu0 0
    %107 = vmatpush1.bf16.msra.mxu0 0
    %108 = vmatprep.subr.bf16.mxu0 0
    %109 = vmatpush1.bf16.msra.mxu0 0
    %110 = vmatprep.subr.bf16.mxu0 0
    %111 = vmatpush1.bf16.msra.mxu0 0
    %112 = vmatprep.subr.bf16.mxu0 0
    %113 = vmatpush1.bf16.msra.mxu0 0
    %114 = vmatprep.subr.bf16.mxu0 0
    %115 = vmatpush1.bf16.msra.mxu0 0
    %116 = vmatprep.subr.bf16.mxu0 0
    %117 = vmatpush1.bf16.msra.mxu0 0
    %118 = vmatprep.subr.bf16.mxu0 0
    %119 = vmatpush1.bf16.msra.mxu0 0
    %120 = vmatprep.subr.bf16.mxu0 0
    %121 = vmatpush1.bf16.msra.mxu0 0
    %122 = vmatprep.subr.bf16.mxu0 0
    %123 = vmatpush1.bf16.msra.mxu0 0
    %124 = vmatprep.mubr.bf16.mxu0 0
    %125 = vmatmul.mubr.bf16.gmra.mrb[0].mxu0 %v87
    %v126 = vpop.f32.mrb[0].mxu0
    %v127 = vadd.f32 %v67, %v126
    %v128 = vpop.f32.mrb[0].mxu0
    %v129 = vpop.f32.mrb[0].mxu0
    %v130 = vadd.f32 %v67, %v129
    %v131 = vpop.f32.mrb[0].mxu0
    %132 = vmatprep.mubr.bf16.mxu0 0
    %133 = vmatmul.mubr.bf16.gmra.mrb[0].mxu0 %v90
    %v134 = vpop.f32.mrb[0].mxu0
    %v135 = vadd.f32 %v67, %v134
    %v136 = vpop.f32.mrb[0].mxu0
    %v137 = vpop.f32.mrb[0].mxu0
    %v138 = vadd.f32 %v67, %v137
    %v139 = vpop.f32.mrb[0].mxu0
    %140 = vdwg.mxu0
    %v141 = vmax.f32 %v127, 0.0
    %v142 = vmax.f32 %v130, 0.0
    %v143 = vmax.f32 %v135, 0.0
    %v144 = vmax.f32 %v138, 0.0
    %v145 = vpack.c.bf16 %v142, %v141
    %v146 = vpack.c.bf16 %v144, %v143
    %v147 = vld [vmem:[#allocation2] sm:$0xf]
    %v148 = vld [vmem:[#allocation2 + $0x4] sm:$0xf]
    %v149 = vld [vmem:[#allocation2 + $0x8] sm:$0xf]
    %v150 = vld [vmem:[#allocation2 + $0xc] sm:$0xf]
    %v151 = vld [vmem:[#allocation2 + $0x10] sm:$0xf]
    %v152 = vld [vmem:[#allocation2 + $0x14] sm:$0xf]
    %v153 = vld [vmem:[#allocation2 + $0x18] sm:$0xf]
    %v154 = vld [vmem:[#allocation2 + $0x1c] sm:$0xf]
    %v155 = vld [vmem:[#allocation2 + $0x20] sm:$0xf]
    %v156 = vld [vmem:[#allocation2 + $0x24] sm:$0xf]
    %v157 = vld [vmem:[#allocation2 + $0x28] sm:$0xf]
    %v158 = vld [vmem:[#allocation2 + $0x2c] sm:$0xf]
    %v159 = vld [vmem:[#allocation2 + $0x30] sm:$0xf]
    %v160 = vld [vmem:[#allocation2 + $0x34] sm:$0xf]
    %v161 = vld [vmem:[#allocation2 + $0x38] sm:$0xf]
    %v162 = vld [vmem:[#allocation2 + $0x3c] sm:$0xf]
    %v163 = vld [vmem:[%s4] sm:$0x1]
    %v165 = vlaneseq
    %v166 = vshrl.u32 %v165, 7
    %v167 = vsub.s32 0, %v166
    %v168 = vrot.slane %v163, %v167
    %v186 = vunpack.c.l.b16 %v147
    %v187 = vunpack.c.l.b16 %v148
    %v188 = vunpack.c.l.b16 %v149
    %v189 = vunpack.c.l.b16 %v150
    %v190 = vunpack.c.l.b16 %v151
    %v191 = vunpack.c.l.b16 %v152
    %v192 = vunpack.c.l.b16 %v153
    %v193 = vunpack.c.l.b16 %v154
    %v194 = vunpack.c.l.b16 %v155
    %v195 = vunpack.c.l.b16 %v156
    %v196 = vunpack.c.l.b16 %v157
    %v197 = vunpack.c.l.b16 %v158
    %v198 = vunpack.c.l.b16 %v159
    %v199 = vunpack.c.l.b16 %v160
    %v200 = vunpack.c.l.b16 %v161
    %v201 = vunpack.c.l.b16 %v162
    %v202 = vpack.c.b16 %v187, %v186
    %v203 = vpack.c.b16 %v189, %v188
    %v204 = vpack.c.b16 %v191, %v190
    %v205 = vpack.c.b16 %v193, %v192
    %v206 = vpack.c.b16 %v195, %v194
    %v207 = vpack.c.b16 %v197, %v196
    %v208 = vpack.c.b16 %v199, %v198
    %v209 = vpack.c.b16 %v201, %v200
    %218 = vmatprep.subr.bf16.mxu0 0
    %219 = vmatpush1.bf16.msra.mxu0 %v202
    %220 = vmatprep.subr.bf16.mxu0 0
    %221 = vmatpush1.bf16.msra.mxu0 %v203
    %222 = vmatprep.subr.bf16.mxu0 0
    %223 = vmatpush1.bf16.msra.mxu0 %v204
    %224 = vmatprep.subr.bf16.mxu0 0
    %225 = vmatpush1.bf16.msra.mxu0 %v205
    %226 = vmatprep.subr.bf16.mxu0 0
    %227 = vmatpush1.bf16.msra.mxu0 %v206
    %228 = vmatprep.subr.bf16.mxu0 0
    %229 = vmatpush1.bf16.msra.mxu0 %v207
    %230 = vmatprep.subr.bf16.mxu0 0
    %231 = vmatpush1.bf16.msra.mxu0 %v208
    %232 = vmatprep.subr.bf16.mxu0 0
    %233 = vmatpush1.bf16.msra.mxu0 %v209
    %234 = vmatprep.subr.bf16.mxu0 0
    %235 = vmatpush1.bf16.msra.mxu0 0
    %236 = vmatprep.subr.bf16.mxu0 0
    %237 = vmatpush1.bf16.msra.mxu0 0
    %238 = vmatprep.subr.bf16.mxu0 0
    %239 = vmatpush1.bf16.msra.mxu0 0
    %240 = vmatprep.subr.bf16.mxu0 0
    %241 = vmatpush1.bf16.msra.mxu0 0
    %242 = vmatprep.subr.bf16.mxu0 0
    %243 = vmatpush1.bf16.msra.mxu0 0
    %244 = vmatprep.subr.bf16.mxu0 0
    %245 = vmatpush1.bf16.msra.mxu0 0
    %246 = vmatprep.subr.bf16.mxu0 0
    %247 = vmatpush1.bf16.msra.mxu0 0
    %248 = vmatprep.subr.bf16.mxu0 0
    %249 = vmatpush1.bf16.msra.mxu0 0
    %250 = vmatprep.mubr.bf16.mxu0 0
    %251 = vmatmul.mubr.bf16.gmra.mrb[0].mxu0 %v145
    %v252 = vpop.f32.mrb[0].mxu0
    %v253 = vadd.f32 %v168, %v252
    %v254 = vpop.f32.mrb[0].mxu0
    %v255 = vpop.f32.mrb[0].mxu0
    %v256 = vadd.f32 %v168, %v255
    %v257 = vpop.f32.mrb[0].mxu0
    %258 = vmatprep.mubr.bf16.mxu0 0
    %259 = vmatmul.mubr.bf16.gmra.mrb[0].mxu0 %v146
    %v260 = vpop.f32.mrb[0].mxu0
    %v261 = vadd.f32 %v168, %v260
    %v262 = vpop.f32.mrb[0].mxu0
    %v263 = vpop.f32.mrb[0].mxu0
    %v264 = vadd.f32 %v168, %v263
    %v265 = vpop.f32.mrb[0].mxu0
    %266 = vdwg.mxu0
    %v267 = vmax.f32 %v253, 0.0
    %v268 = vmax.f32 %v256, 0.0
    %v269 = vmax.f32 %v261, 0.0
    %v270 = vmax.f32 %v264, 0.0
    %v271 = vpack.c.bf16 %v268, %v267
    %v272 = vpack.c.bf16 %v270, %v269
    %s273 = scalar_lea.vmem [#allocation2], 64
    %v274 = vld [vmem:[%s273] sm:$0xf]
    %v275 = vld [vmem:[%s273 + $0x4] sm:$0xf]
    %v276 = vld [vmem:[%s273 + $0x8] sm:$0xf]
    %v277 = vld [vmem:[%s273 + $0xc] sm:$0xf]
    %v278 = vld [vmem:[%s273 + $0x10] sm:$0xf]
    %v279 = vld [vmem:[%s273 + $0x14] sm:$0xf]
    %v280 = vld [vmem:[%s273 + $0x18] sm:$0xf]
    %v281 = vld [vmem:[%s273 + $0x1c] sm:$0xf]
    %v282 = vld [vmem:[%s273 + $0x20] sm:$0xf]
    %v283 = vld [vmem:[%s273 + $0x24] sm:$0xf]
    %v284 = vld [vmem:[%s273 + $0x28] sm:$0xf]
    %v285 = vld [vmem:[%s273 + $0x2c] sm:$0xf]
    %v286 = vld [vmem:[%s273 + $0x30] sm:$0xf]
    %v287 = vld [vmem:[%s273 + $0x34] sm:$0xf]
    %v288 = vld [vmem:[%s273 + $0x38] sm:$0xf]
    %v289 = vld [vmem:[%s273 + $0x3c] sm:$0xf]
    %s290 = scalar_lea.vmem %s4, 1
    %v291 = vld [vmem:[%s290] sm:$0x1]
    %v293 = vlaneseq
    %v294 = vshrl.u32 %v293, 7
    %v295 = vsub.s32 0, %v294
    %v296 = vrot.slane %v291, %v295
    %v314 = vunpack.c.l.b16 %v274
    %v315 = vunpack.c.l.b16 %v275
    %v316 = vunpack.c.l.b16 %v276
    %v317 = vunpack.c.l.b16 %v277
    %v318 = vunpack.c.l.b16 %v278
    %v319 = vunpack.c.l.b16 %v279
    %v320 = vunpack.c.l.b16 %v280
    %v321 = vunpack.c.l.b16 %v281
    %v322 = vunpack.c.l.b16 %v282
    %v323 = vunpack.c.l.b16 %v283
    %v324 = vunpack.c.l.b16 %v284
    %v325 = vunpack.c.l.b16 %v285
    %v326 = vunpack.c.l.b16 %v286
    %v327 = vunpack.c.l.b16 %v287
    %v328 = vunpack.c.l.b16 %v288
    %v329 = vunpack.c.l.b16 %v289
    %v330 = vpack.c.b16 %v315, %v314
    %v331 = vpack.c.b16 %v317, %v316
    %v332 = vpack.c.b16 %v319, %v318
    %v333 = vpack.c.b16 %v321, %v320
    %v334 = vpack.c.b16 %v323, %v322
    %v335 = vpack.c.b16 %v325, %v324
    %v336 = vpack.c.b16 %v327, %v326
    %v337 = vpack.c.b16 %v329, %v328
    %346 = vmatprep.subr.bf16.mxu0 0
    %347 = vmatpush1.bf16.msra.mxu0 %v330
    %348 = vmatprep.subr.bf16.mxu0 0
    %349 = vmatpush1.bf16.msra.mxu0 %v331
    %350 = vmatprep.subr.bf16.mxu0 0
    %351 = vmatpush1.bf16.msra.mxu0 %v332
    %352 = vmatprep.subr.bf16.mxu0 0
    %353 = vmatpush1.bf16.msra.mxu0 %v333
    %354 = vmatprep.subr.bf16.mxu0 0
    %355 = vmatpush1.bf16.msra.mxu0 %v334
    %356 = vmatprep.subr.bf16.mxu0 0
    %357 = vmatpush1.bf16.msra.mxu0 %v335
    %358 = vmatprep.subr.bf16.mxu0 0
    %359 = vmatpush1.bf16.msra.mxu0 %v336
    %360 = vmatprep.subr.bf16.mxu0 0
    %361 = vmatpush1.bf16.msra.mxu0 %v337
    %362 = vmatprep.subr.bf16.mxu0 0
    %363 = vmatpush1.bf16.msra.mxu0 0
    %364 = vmatprep.subr.bf16.mxu0 0
    %365 = vmatpush1.bf16.msra.mxu0 0
    %366 = vmatprep.subr.bf16.mxu0 0
    %367 = vmatpush1.bf16.msra.mxu0 0
    %368 = vmatprep.subr.bf16.mxu0 0
    %369 = vmatpush1.bf16.msra.mxu0 0
    %370 = vmatprep.subr.bf16.mxu0 0
    %371 = vmatpush1.bf16.msra.mxu0 0
    %372 = vmatprep.subr.bf16.mxu0 0
    %373 = vmatpush1.bf16.msra.mxu0 0
    %374 = vmatprep.subr.bf16.mxu0 0
    %375 = vmatpush1.bf16.msra.mxu0 0
    %376 = vmatprep.subr.bf16.mxu0 0
    %377 = vmatpush1.bf16.msra.mxu0 0
    %378 = vmatprep.mubr.bf16.mxu0 0
    %379 = vmatmul.mubr.bf16.gmra.mrb[0].mxu0 %v271
    %v380 = vpop.f32.mrb[0].mxu0
    %v381 = vadd.f32 %v296, %v380
    %v382 = vpop.f32.mrb[0].mxu0
    %v383 = vpop.f32.mrb[0].mxu0
    %v384 = vadd.f32 %v296, %v383
    %v385 = vpop.f32.mrb[0].mxu0
    %386 = vmatprep.mubr.bf16.mxu0 0
    %387 = vmatmul.mubr.bf16.gmra.mrb[0].mxu0 %v272
    %v388 = vpop.f32.mrb[0].mxu0
    %v389 = vadd.f32 %v296, %v388
    %v390 = vpop.f32.mrb[0].mxu0
    %v391 = vpop.f32.mrb[0].mxu0
    %v392 = vadd.f32 %v296, %v391
    %v393 = vpop.f32.mrb[0].mxu0
    %394 = vdwg.mxu0
    %v395 = vmax.f32 %v381, 0.0
    %v396 = vmax.f32 %v384, 0.0
    %v397 = vmax.f32 %v389, 0.0
    %v398 = vmax.f32 %v392, 0.0
    %v399 = vpack.c.bf16 %v396, %v395
    %v400 = vpack.c.bf16 %v398, %v397
    %v401 = vld [vmem:[#allocation5] sm:$0xf]
    %v402 = vld [vmem:[#allocation5 + $0x4] sm:$0xf]
    %v403 = vld [vmem:[#allocation5 + $0x8] sm:$0xf]
    %v404 = vld [vmem:[#allocation5 + $0xc] sm:$0xf]
    %v405 = vld [vmem:[#allocation5 + $0x10] sm:$0xf]
    %v406 = vld [vmem:[#allocation5 + $0x14] sm:$0xf]
    %v407 = vld [vmem:[#allocation5 + $0x18] sm:$0xf]
    %v408 = vld [vmem:[#allocation5 + $0x1c] sm:$0xf]
    %v409 = vld [vmem:[#allocation5 + $0x20] sm:$0xf]
    %v410 = vld [vmem:[#allocation5 + $0x24] sm:$0xf]
    %v411 = vld [vmem:[#allocation5 + $0x28] sm:$0xf]
    %v412 = vld [vmem:[#allocation5 + $0x2c] sm:$0xf]
    %v413 = vld [vmem:[#allocation5 + $0x30] sm:$0xf]
    %v414 = vld [vmem:[#allocation5 + $0x34] sm:$0xf]
    %v415 = vld [vmem:[#allocation5 + $0x38] sm:$0xf]
    %v416 = vld [vmem:[#allocation5 + $0x3c] sm:$0xf]
    %v417 = vld [vmem:[%s6] sm:$0x1]
    %v419 = vlaneseq
    %v420 = vshrl.u32 %v419, 7
    %v421 = vsub.s32 0, %v420
    %v422 = vrot.slane %v417, %v421
    %v440 = vunpack.c.l.b16 %v401
    %v441 = vunpack.c.l.b16 %v402
    %v442 = vunpack.c.l.b16 %v403
    %v443 = vunpack.c.l.b16 %v404
    %v444 = vunpack.c.l.b16 %v405
    %v445 = vunpack.c.l.b16 %v406
    %v446 = vunpack.c.l.b16 %v407
    %v447 = vunpack.c.l.b16 %v408
    %v448 = vunpack.c.l.b16 %v409
    %v449 = vunpack.c.l.b16 %v410
    %v450 = vunpack.c.l.b16 %v411
    %v451 = vunpack.c.l.b16 %v412
    %v452 = vunpack.c.l.b16 %v413
    %v453 = vunpack.c.l.b16 %v414
    %v454 = vunpack.c.l.b16 %v415
    %v455 = vunpack.c.l.b16 %v416
    %v456 = vpack.c.b16 %v441, %v440
    %v457 = vpack.c.b16 %v443, %v442
    %v458 = vpack.c.b16 %v445, %v444
    %v459 = vpack.c.b16 %v447, %v446
    %v460 = vpack.c.b16 %v449, %v448
    %v461 = vpack.c.b16 %v451, %v450
    %v462 = vpack.c.b16 %v453, %v452
    %v463 = vpack.c.b16 %v455, %v454
    %472 = vmatprep.subr.bf16.mxu0 0
    %473 = vmatpush1.bf16.msra.mxu0 %v456
    %474 = vmatprep.subr.bf16.mxu0 0
    %475 = vmatpush1.bf16.msra.mxu0 %v457
    %476 = vmatprep.subr.bf16.mxu0 0
    %477 = vmatpush1.bf16.msra.mxu0 %v458
    %478 = vmatprep.subr.bf16.mxu0 0
    %479 = vmatpush1.bf16.msra.mxu0 %v459
    %480 = vmatprep.subr.bf16.mxu0 0
    %481 = vmatpush1.bf16.msra.mxu0 %v460
    %482 = vmatprep.subr.bf16.mxu0 0
    %483 = vmatpush1.bf16.msra.mxu0 %v461
    %484 = vmatprep.subr.bf16.mxu0 0
    %485 = vmatpush1.bf16.msra.mxu0 %v462
    %486 = vmatprep.subr.bf16.mxu0 0
    %487 = vmatpush1.bf16.msra.mxu0 %v463
    %488 = vmatprep.subr.bf16.mxu0 0
    %489 = vmatpush1.bf16.msra.mxu0 0
    %490 = vmatprep.subr.bf16.mxu0 0
    %491 = vmatpush1.bf16.msra.mxu0 0
    %492 = vmatprep.subr.bf16.mxu0 0
    %493 = vmatpush1.bf16.msra.mxu0 0
    %494 = vmatprep.subr.bf16.mxu0 0
    %495 = vmatpush1.bf16.msra.mxu0 0
    %496 = vmatprep.subr.bf16.mxu0 0
    %497 = vmatpush1.bf16.msra.mxu0 0
    %498 = vmatprep.subr.bf16.mxu0 0
    %499 = vmatpush1.bf16.msra.mxu0 0
    %500 = vmatprep.subr.bf16.mxu0 0
    %501 = vmatpush1.bf16.msra.mxu0 0
    %502 = vmatprep.subr.bf16.mxu0 0
    %503 = vmatpush1.bf16.msra.mxu0 0
    %504 = vmatprep.mubr.bf16.mxu0 0
    %505 = vmatmul.mubr.bf16.gmra.mrb[0].mxu0 %v399
    %v506 = vpop.f32.mrb[0].mxu0
    %v507 = vadd.f32 %v422, %v506
    %v508 = vpop.f32.mrb[0].mxu0
    %v509 = vpop.f32.mrb[0].mxu0
    %v510 = vadd.f32 %v422, %v509
    %v511 = vpop.f32.mrb[0].mxu0
    %512 = vmatprep.mubr.bf16.mxu0 0
    %513 = vmatmul.mubr.bf16.gmra.mrb[0].mxu0 %v400
    %v514 = vpop.f32.mrb[0].mxu0
    %v515 = vadd.f32 %v422, %v514
    %v516 = vpop.f32.mrb[0].mxu0
    %v517 = vpop.f32.mrb[0].mxu0
    %v518 = vadd.f32 %v422, %v517
    %v519 = vpop.f32.mrb[0].mxu0
    %520 = vdwg.mxu0
    %521 = vst [vmem:[#allocation7] sm:$0xff] %v507
    %522 = vst [vmem:[#allocation7 + $0x8] sm:$0xff] %v510
    %523 = vst [vmem:[#allocation7 + $0x10] sm:$0xff] %v515
    %524 = vst [vmem:[#allocation7 + $0x18] sm:$0xff] %v518
    // Predicated region
    $region38: #{tpu_custom_call.1} parent=1 // pred_check
      _
    $region39: #{tpu_custom_call.1} parent=1 // pred_check_branch
      %526 = sbr.rel (0) target = $region41
    $region40: #{tpu_custom_call.1} parent=1 // pred_region
      %s528 = ssub.s32 512, 512
      %529 = vsyncadd [#allocation4], %s528
      %s530 = sshll.u32 [#allocation7], 4
      %s531 = int_to_ptr.vmem [resolvable:$true] %s530
      %536 = dma.vmem_to_hbm [thread:$0]  %s531, 512, %s7, [#allocation4], 128, 128, 8
    $region41: #{tpu_custom_call.1} parent=1 // pred_fallthru
      _
    // Predicated region
    $region42: #{tpu_custom_call.1} parent=1 // pred_check
      _
    $region43: #{tpu_custom_call.1} parent=1 // pred_check_branch
      %538 = sbr.rel (0) target = $region45
    $region44: #{tpu_custom_call.1} parent=1 // pred_region
      %539 = dma.done [#allocation4], 512
    $region45: #{tpu_custom_call.1} parent=1 // pred_fallthru
      _
    %540 = vsyncpa [#allocation3], 1
    %541 = vsyncpa [#allocation6], 1
    %542 = vsyncpa [#allocation4], 1

// kernel: tpu_custom_call.1
$region0: #{tpu_custom_call.1}
  #allocation0 [shape = 'u32[]', space=smem, size = 0x4, offset = 0x4, fixed_abs, tag = 'smem constant byte address 0x4 - core index']
  #allocation1 [shape = 'u32[144,128]{1,0:T(1,128)}', space=vmem, size = 0x12000, scoped, tag = 'internal scratch']
  %s0 = inlined_call_operand.vmem [shape: bf16[32,16], index: 0, kind: input, shape index: {}]
  %s1 = inlined_call_operand.vmem [shape: bf16[16,128], index: 1, kind: input, shape index: {}]
  %s2 = inlined_call_operand.vmem [shape: f32[1,128], index: 2, kind: input, shape index: {}]
  %s3 = inlined_call_operand.hbm [shape: bf16[2,128,128], index: 3, kind: input, shape index: {}]
  %s4 = inlined_call_operand.vmem [shape: f32[2,1,128], index: 4, kind: input, shape index: {}]
  %s5 = inlined_call_operand.hbm [shape: bf16[128,128], index: 5, kind: input, shape index: {}]
  %s6 = inlined_call_operand.vmem [shape: f32[1,128], index: 6, kind: input, shape index: {}]
  %s7 = inlined_call_operand.hbm [shape: f32[32,128], index: 7, kind: output, shape index: {}]
  %s8 = sld [smem:[#allocation0]]
  $region46: #{tpu_custom_call.1} parent=0
    _
  %s10 = ssub.s32 1, %s8
  %s11 = scalar_select 0, %s10, %s8
  $region1: #{tpu_custom_call.1} parent=0
    #allocation2 [shape = 'u8[65536]{0}', space=vmem, size = 0x10000, scoped, tag = 'input window, operand 3, single buffered']
    #allocation3 [shape = 's32[1]{0}', space=sflag, size = 0x4, scoped, tag = 'scoped memory for tpu_custom_call.1']
    #allocation4 [shape = 's32[1]{0}', space=sflag, size = 0x4, scoped, tag = 'scoped memory for tpu_custom_call.1']
    #allocation5 [shape = 'u8[32768]{0}', space=vmem, size = 0x8000, scoped, tag = 'input window, operand 5, single buffered']
    #allocation6 [shape = 's32[1]{0}', space=sflag, size = 0x4, scoped, tag = 'scoped memory for tpu_custom_call.1']
    #allocation7 [shape = 'u8[16384]{0}', space=vmem, size = 0x4000, scoped, tag = 'output window, operand 0, single buffered']
    %12 = vsyncpa [#allocation3], 0
    %13 = vsyncpa [#allocation6], 0
    %14 = vsyncpa [#allocation4], 0
    // Predicated region
    $region2: #{tpu_custom_call.1} parent=1 // pred_check
      _
    $region3: #{tpu_custom_call.1} parent=1 // pred_check_branch
      %16 = sbr.rel (0) target = $region5
    $region4: #{tpu_custom_call.1} parent=1 // pred_region
      _
    $region5: #{tpu_custom_call.1} parent=1 // pred_fallthru
      _
    // Predicated region
    $region6: #{tpu_custom_call.1} parent=1 // pred_check
      _
    $region7: #{tpu_custom_call.1} parent=1 // pred_check_branch
      %18 = sbr.rel (0) target = $region9
    $region8: #{tpu_custom_call.1} parent=1 // pred_region
      _
    $region9: #{tpu_custom_call.1} parent=1 // pred_fallthru
      _
    // Predicated region
    $region10: #{tpu_custom_call.1} parent=1 // pred_check
      _
    $region11: #{tpu_custom_call.1} parent=1 // pred_check_branch
      %20 = sbr.rel (0) target = $region13
    $region12: #{tpu_custom_call.1} parent=1 // pred_region
      _
    $region13: #{tpu_custom_call.1} parent=1 // pred_fallthru
      _
    // Predicated region
    $region14: #{tpu_custom_call.1} parent=1 // pred_check
      _
    $region15: #{tpu_custom_call.1} parent=1 // pred_check_branch
      %22 = sbr.rel (0) target = $region17
    $region16: #{tpu_custom_call.1} parent=1 // pred_region
      %s24 = ssub.s32 2048, 2048
      %25 = vsyncadd [#allocation3], %s24
      %s26 = sshll.u32 [#allocation2], 4
      %s27 = int_to_ptr.vmem [resolvable:$true] %s26
      %32 = dma.hbm_to_vmem [thread:$0]  %s3, 2048, %s27, [#allocation3], 64, 64, 4
    $region17: #{tpu_custom_call.1} parent=1 // pred_fallthru
      _
    // Predicated region
    $region18: #{tpu_custom_call.1} parent=1 // pred_check
      _
    $region19: #{tpu_custom_call.1} parent=1 // pred_check_branch
      %34 = sbr.rel (0) target = $region21
    $region20: #{tpu_custom_call.1} parent=1 // pred_region
      _
    $region21: #{tpu_custom_call.1} parent=1 // pred_fallthru
      _
    // Predicated region
    $region22: #{tpu_custom_call.1} parent=1 // pred_check
      _
    $region23: #{tpu_custom_call.1} parent=1 // pred_check_branch
      %36 = sbr.rel (0) target = $region25
    $region24: #{tpu_custom_call.1} parent=1 // pred_region
      %s38 = ssub.s32 1024, 1024
      %39 = vsyncadd [#allocation6], %s38
      %s40 = sshll.u32 [#allocation5], 4
      %s41 = int_to_ptr.vmem [resolvable:$true] %s40
      %46 = dma.hbm_to_vmem [thread:$0]  %s5, 1024, %s41, [#allocation6], 64, 64, 4
    $region25: #{tpu_custom_call.1} parent=1 // pred_fallthru
      _
    // Predicated region
    $region26: #{tpu_custom_call.1} parent=1 // pred_check
      _
    $region27: #{tpu_custom_call.1} parent=1 // pred_check_branch
      %48 = sbr.rel (0) target = $region29
    $region28: #{tpu_custom_call.1} parent=1 // pred_region
      _
    $region29: #{tpu_custom_call.1} parent=1 // pred_fallthru
      _
    // Predicated region
    $region30: #{tpu_custom_call.1} parent=1 // pred_check
      _
    $region31: #{tpu_custom_call.1} parent=1 // pred_check_branch
      %50 = sbr.rel (0) target = $region33
    $region32: #{tpu_custom_call.1} parent=1 // pred_region
      %51 = dma.done [#allocation3], 2048
    $region33: #{tpu_custom_call.1} parent=1 // pred_fallthru
      _
    // Predicated region
    $region34: #{tpu_custom_call.1} parent=1 // pred_check
      _
    $region35: #{tpu_custom_call.1} parent=1 // pred_check_branch
      %53 = sbr.rel (0) target = $region37
    $region36: #{tpu_custom_call.1} parent=1 // pred_region
      %54 = dma.done [#allocation6], 1024
    $region37: #{tpu_custom_call.1} parent=1 // pred_fallthru
      _
    %v56 = vld [vmem:[%s0] sm:$0xf]
    %v57 = vld [vmem:[%s0 + $0x4] sm:$0xf]
    %v58 = vld [vmem:[%s0 + $0x8] sm:$0xf]
    %v59 = vld [vmem:[%s0 + $0xc] sm:$0xf]
    %v60 = vld [vmem:[%s1] sm:$0xf]
    %v61 = vld [vmem:[%s1 + $0x4] sm:$0xf]
    %v62 = vld [vmem:[%s2] sm:$0x1]
    %v64 = vlaneseq
    %v65 = vshrl.u32 %v64, 7
    %v66 = vsub.s32 0, %v65
    %v67 = vrot.slane %v62, %v66
    %v73 = vunpack.c.l.b16 %v56
    %v74 = vunpack.c.l.b16 %v57
    %v75 = vunpack.c.l.b16 %v58
    %v76 = vunpack.c.l.b16 %v59
    %v77 = vpack.c.b16 %v74, %v73
    %v78 = vpack.c.b16 %v76, %v75
    %v81 = vunpack.c.l.b16 %v60
    %v82 = vunpack.c.l.b16 %v61
    %v83 = vpack.c.b16 %v82, %v81
    %vm85 = vcmask 130048
    %v87 = vsel %vm85, %v77, 0
    %v90 = vsel %vm85, %v78, 0
    %92 = vmatprep.subr.bf16.mxu0 0
    %93 = vmatpush1.bf16.msra.mxu0 %v83
    %94 = vmatprep.subr.bf16.mxu0 0
    %95 = vmatpush1.bf16.msra.mxu0 0
    %96 = vmatprep.subr.bf16.mxu0 0
    %97 = vmatpush1.bf16.msra.mxu0 0
    %98 = vmatprep.subr.bf16.mxu0 0
    %99 = vmatpush1.bf16.msra.mxu0 0
    %100 = vmatprep.subr.bf16.mxu0 0
    %101 = vmatpush1.bf16.msra.mxu0 0
    %102 = vmatprep.subr.bf16.mxu0 0
    %103 = vmatpush1.bf16.msra.mxu0 0
    %104 = vmatprep.subr.bf16.mxu0 0
    %105 = vmatpush1.bf16.msra.mxu0 0
    %106 = vmatprep.subr.bf16.mxu0 0
    %107 = vmatpush1.bf16.msra.mxu0 0
    %108 = vmatprep.subr.bf16.mxu0 0
    %109 = vmatpush1.bf16.msra.mxu0 0
    %110 = vmatprep.subr.bf16.mxu0 0
    %111 = vmatpush1.bf16.msra.mxu0 0
    %112 = vmatprep.subr.bf16.mxu0 0
    %113 = vmatpush1.bf16.msra.mxu0 0
    %114 = vmatprep.subr.bf16.mxu0 0
    %115 = vmatpush1.bf16.msra.mxu0 0
    %116 = vmatprep.subr.bf16.mxu0 0
    %117 = vmatpush1.bf16.msra.mxu0 0
    %118 = vmatprep.subr.bf16.mxu0 0
    %119 = vmatpush1.bf16.msra.mxu0 0
    %120 = vmatprep.subr.bf16.mxu0 0
    %121 = vmatpush1.bf16.msra.mxu0 0
    %122 = vmatprep.subr.bf16.mxu0 0
    %123 = vmatpush1.bf16.msra.mxu0 0
    %124 = vmatprep.mubr.bf16.mxu0 0
    %125 = vmatmul.mubr.bf16.gmra.mrb[0].mxu0 %v87
    %v126 = vpop.f32.mrb[0].mxu0
    %v127 = vadd.f32 %v67, %v126
    %v128 = vpop.f32.mrb[0].mxu0
    %v129 = vpop.f32.mrb[0].mxu0
    %v130 = vadd.f32 %v67, %v129
    %v131 = vpop.f32.mrb[0].mxu0
    %132 = vmatprep.mubr.bf16.mxu0 0
    %133 = vmatmul.mubr.bf16.gmra.mrb[0].mxu0 %v90
    %v134 = vpop.f32.mrb[0].mxu0
    %v135 = vadd.f32 %v67, %v134
    %v136 = vpop.f32.mrb[0].mxu0
    %v137 = vpop.f32.mrb[0].mxu0
    %v138 = vadd.f32 %v67, %v137
    %v139 = vpop.f32.mrb[0].mxu0
    %140 = vdwg.mxu0
    %v141 = vmax.f32 %v127, 0.0
    %v142 = vmax.f32 %v130, 0.0
    %v143 = vmax.f32 %v135, 0.0
    %v144 = vmax.f32 %v138, 0.0
    %v145 = vpack.c.bf16 %v142, %v141
    %v146 = vpack.c.bf16 %v144, %v143
    %v147 = vld [vmem:[#allocation2] sm:$0xf]
    %v148 = vld [vmem:[#allocation2 + $0x4] sm:$0xf]
    %v149 = vld [vmem:[#allocation2 + $0x8] sm:$0xf]
    %v150 = vld [vmem:[#allocation2 + $0xc] sm:$0xf]
    %v151 = vld [vmem:[#allocation2 + $0x10] sm:$0xf]
    %v152 = vld [vmem:[#allocation2 + $0x14] sm:$0xf]
    %v153 = vld [vmem:[#allocation2 + $0x18] sm:$0xf]
    %v154 = vld [vmem:[#allocation2 + $0x1c] sm:$0xf]
    %v155 = vld [vmem:[#allocation2 + $0x20] sm:$0xf]
    %v156 = vld [vmem:[#allocation2 + $0x24] sm:$0xf]
    %v157 = vld [vmem:[#allocation2 + $0x28] sm:$0xf]
    %v158 = vld [vmem:[#allocation2 + $0x2c] sm:$0xf]
    %v159 = vld [vmem:[#allocation2 + $0x30] sm:$0xf]
    %v160 = vld [vmem:[#allocation2 + $0x34] sm:$0xf]
    %v161 = vld [vmem:[#allocation2 + $0x38] sm:$0xf]
    %v162 = vld [vmem:[#allocation2 + $0x3c] sm:$0xf]
    %v163 = vld [vmem:[%s4] sm:$0x1]
    %v165 = vlaneseq
    %v166 = vshrl.u32 %v165, 7
    %v167 = vsub.s32 0, %v166
    %v168 = vrot.slane %v163, %v167
    %v186 = vunpack.c.l.b16 %v147
    %v187 = vunpack.c.l.b16 %v148
    %v188 = vunpack.c.l.b16 %v149
    %v189 = vunpack.c.l.b16 %v150
    %v190 = vunpack.c.l.b16 %v151
    %v191 = vunpack.c.l.b16 %v152
    %v192 = vunpack.c.l.b16 %v153
    %v193 = vunpack.c.l.b16 %v154
    %v194 = vunpack.c.l.b16 %v155
    %v195 = vunpack.c.l.b16 %v156
    %v196 = vunpack.c.l.b16 %v157
    %v197 = vunpack.c.l.b16 %v158
    %v198 = vunpack.c.l.b16 %v159
    %v199 = vunpack.c.l.b16 %v160
    %v200 = vunpack.c.l.b16 %v161
    %v201 = vunpack.c.l.b16 %v162
    %v202 = vpack.c.b16 %v187, %v186
    %v203 = vpack.c.b16 %v189, %v188
    %v204 = vpack.c.b16 %v191, %v190
    %v205 = vpack.c.b16 %v193, %v192
    %v206 = vpack.c.b16 %v195, %v194
    %v207 = vpack.c.b16 %v197, %v196
    %v208 = vpack.c.b16 %v199, %v198
    %v209 = vpack.c.b16 %v201, %v200
    %218 = vmatprep.subr.bf16.mxu0 0
    %219 = vmatpush1.bf16.msra.mxu0 %v202
    %220 = vmatprep.subr.bf16.mxu0 0
    %221 = vmatpush1.bf16.msra.mxu0 %v203
    %222 = vmatprep.subr.bf16.mxu0 0
    %223 = vmatpush1.bf16.msra.mxu0 %v204
    %224 = vmatprep.subr.bf16.mxu0 0
    %225 = vmatpush1.bf16.msra.mxu0 %v205
    %226 = vmatprep.subr.bf16.mxu0 0
    %227 = vmatpush1.bf16.msra.mxu0 %v206
    %228 = vmatprep.subr.bf16.mxu0 0
    %229 = vmatpush1.bf16.msra.mxu0 %v207
    %230 = vmatprep.subr.bf16.mxu0 0
    %231 = vmatpush1.bf16.msra.mxu0 %v208
    %232 = vmatprep.subr.bf16.mxu0 0
    %233 = vmatpush1.bf16.msra.mxu0 %v209
    %234 = vmatprep.subr.bf16.mxu0 0
    %235 = vmatpush1.bf16.msra.mxu0 0
    %236 = vmatprep.subr.bf16.mxu0 0
    %237 = vmatpush1.bf16.msra.mxu0 0
    %238 = vmatprep.subr.bf16.mxu0 0
    %239 = vmatpush1.bf16.msra.mxu0 0
    %240 = vmatprep.subr.bf16.mxu0 0
    %241 = vmatpush1.bf16.msra.mxu0 0
    %242 = vmatprep.subr.bf16.mxu0 0
    %243 = vmatpush1.bf16.msra.mxu0 0
    %244 = vmatprep.subr.bf16.mxu0 0
    %245 = vmatpush1.bf16.msra.mxu0 0
    %246 = vmatprep.subr.bf16.mxu0 0
    %247 = vmatpush1.bf16.msra.mxu0 0
    %248 = vmatprep.subr.bf16.mxu0 0
    %249 = vmatpush1.bf16.msra.mxu0 0
    %250 = vmatprep.mubr.bf16.mxu0 0
    %251 = vmatmul.mubr.bf16.gmra.mrb[0].mxu0 %v145
    %v252 = vpop.f32.mrb[0].mxu0
    %v253 = vadd.f32 %v168, %v252
    %v254 = vpop.f32.mrb[0].mxu0
    %v255 = vpop.f32.mrb[0].mxu0
    %v256 = vadd.f32 %v168, %v255
    %v257 = vpop.f32.mrb[0].mxu0
    %258 = vmatprep.mubr.bf16.mxu0 0
    %259 = vmatmul.mubr.bf16.gmra.mrb[0].mxu0 %v146
    %v260 = vpop.f32.mrb[0].mxu0
    %v261 = vadd.f32 %v168, %v260
    %v262 = vpop.f32.mrb[0].mxu0
    %v263 = vpop.f32.mrb[0].mxu0
    %v264 = vadd.f32 %v168, %v263
    %v265 = vpop.f32.mrb[0].mxu0
    %266 = vdwg.mxu0
    %v267 = vmax.f32 %v253, 0.0
    %v268 = vmax.f32 %v256, 0.0
    %v269 = vmax.f32 %v261, 0.0
    %v270 = vmax.f32 %v264, 0.0
    %v271 = vpack.c.bf16 %v268, %v267
    %v272 = vpack.c.bf16 %v270, %v269
    %s273 = scalar_lea.vmem [#allocation2], 64
    %v274 = vld [vmem:[%s273] sm:$0xf]
    %v275 = vld [vmem:[%s273 + $0x4] sm:$0xf]
    %v276 = vld [vmem:[%s273 + $0x8] sm:$0xf]
    %v277 = vld [vmem:[%s273 + $0xc] sm:$0xf]
    %v278 = vld [vmem:[%s273 + $0x10] sm:$0xf]
    %v279 = vld [vmem:[%s273 + $0x14] sm:$0xf]
    %v280 = vld [vmem:[%s273 + $0x18] sm:$0xf]
    %v281 = vld [vmem:[%s273 + $0x1c] sm:$0xf]
    %v282 = vld [vmem:[%s273 + $0x20] sm:$0xf]
    %v283 = vld [vmem:[%s273 + $0x24] sm:$0xf]
    %v284 = vld [vmem:[%s273 + $0x28] sm:$0xf]
    %v285 = vld [vmem:[%s273 + $0x2c] sm:$0xf]
    %v286 = vld [vmem:[%s273 + $0x30] sm:$0xf]
    %v287 = vld [vmem:[%s273 + $0x34] sm:$0xf]
    %v288 = vld [vmem:[%s273 + $0x38] sm:$0xf]
    %v289 = vld [vmem:[%s273 + $0x3c] sm:$0xf]
    %s290 = scalar_lea.vmem %s4, 1
    %v291 = vld [vmem:[%s290] sm:$0x1]
    %v293 = vlaneseq
    %v294 = vshrl.u32 %v293, 7
    %v295 = vsub.s32 0, %v294
    %v296 = vrot.slane %v291, %v295
    %v314 = vunpack.c.l.b16 %v274
    %v315 = vunpack.c.l.b16 %v275
    %v316 = vunpack.c.l.b16 %v276
    %v317 = vunpack.c.l.b16 %v277
    %v318 = vunpack.c.l.b16 %v278
    %v319 = vunpack.c.l.b16 %v279
    %v320 = vunpack.c.l.b16 %v280
    %v321 = vunpack.c.l.b16 %v281
    %v322 = vunpack.c.l.b16 %v282
    %v323 = vunpack.c.l.b16 %v283
    %v324 = vunpack.c.l.b16 %v284
    %v325 = vunpack.c.l.b16 %v285
    %v326 = vunpack.c.l.b16 %v286
    %v327 = vunpack.c.l.b16 %v287
    %v328 = vunpack.c.l.b16 %v288
    %v329 = vunpack.c.l.b16 %v289
    %v330 = vpack.c.b16 %v315, %v314
    %v331 = vpack.c.b16 %v317, %v316
    %v332 = vpack.c.b16 %v319, %v318
    %v333 = vpack.c.b16 %v321, %v320
    %v334 = vpack.c.b16 %v323, %v322
    %v335 = vpack.c.b16 %v325, %v324
    %v336 = vpack.c.b16 %v327, %v326
    %v337 = vpack.c.b16 %v329, %v328
    %346 = vmatprep.subr.bf16.mxu0 0
    %347 = vmatpush1.bf16.msra.mxu0 %v330
    %348 = vmatprep.subr.bf16.mxu0 0
    %349 = vmatpush1.bf16.msra.mxu0 %v331
    %350 = vmatprep.subr.bf16.mxu0 0
    %351 = vmatpush1.bf16.msra.mxu0 %v332
    %352 = vmatprep.subr.bf16.mxu0 0
    %353 = vmatpush1.bf16.msra.mxu0 %v333
    %354 = vmatprep.subr.bf16.mxu0 0
    %355 = vmatpush1.bf16.msra.mxu0 %v334
    %356 = vmatprep.subr.bf16.mxu0 0
    %357 = vmatpush1.bf16.msra.mxu0 %v335
    %358 = vmatprep.subr.bf16.mxu0 0
    %359 = vmatpush1.bf16.msra.mxu0 %v336
    %360 = vmatprep.subr.bf16.mxu0 0
    %361 = vmatpush1.bf16.msra.mxu0 %v337
    %362 = vmatprep.subr.bf16.mxu0 0
    %363 = vmatpush1.bf16.msra.mxu0 0
    %364 = vmatprep.subr.bf16.mxu0 0
    %365 = vmatpush1.bf16.msra.mxu0 0
    %366 = vmatprep.subr.bf16.mxu0 0
    %367 = vmatpush1.bf16.msra.mxu0 0
    %368 = vmatprep.subr.bf16.mxu0 0
    %369 = vmatpush1.bf16.msra.mxu0 0
    %370 = vmatprep.subr.bf16.mxu0 0
    %371 = vmatpush1.bf16.msra.mxu0 0
    %372 = vmatprep.subr.bf16.mxu0 0
    %373 = vmatpush1.bf16.msra.mxu0 0
    %374 = vmatprep.subr.bf16.mxu0 0
    %375 = vmatpush1.bf16.msra.mxu0 0
    %376 = vmatprep.subr.bf16.mxu0 0
    %377 = vmatpush1.bf16.msra.mxu0 0
    %378 = vmatprep.mubr.bf16.mxu0 0
    %379 = vmatmul.mubr.bf16.gmra.mrb[0].mxu0 %v271
    %v380 = vpop.f32.mrb[0].mxu0
    %v381 = vadd.f32 %v296, %v380
    %v382 = vpop.f32.mrb[0].mxu0
    %v383 = vpop.f32.mrb[0].mxu0
    %v384 = vadd.f32 %v296, %v383
    %v385 = vpop.f32.mrb[0].mxu0
    %386 = vmatprep.mubr.bf16.mxu0 0
    %387 = vmatmul.mubr.bf16.gmra.mrb[0].mxu0 %v272
    %v388 = vpop.f32.mrb[0].mxu0
    %v389 = vadd.f32 %v296, %v388
    %v390 = vpop.f32.mrb[0].mxu0
    %v391 = vpop.f32.mrb[0].mxu0
    %v392 = vadd.f32 %v296, %v391
    %v393 = vpop.f32.mrb[0].mxu0
    %394 = vdwg.mxu0
    %v395 = vmax.f32 %v381, 0.0
    %v396 = vmax.f32 %v384, 0.0
    %v397 = vmax.f32 %v389, 0.0
    %v398 = vmax.f32 %v392, 0.0
    %v399 = vpack.c.bf16 %v396, %v395
    %v400 = vpack.c.bf16 %v398, %v397
    %v401 = vld [vmem:[#allocation5] sm:$0xf]
    %v402 = vld [vmem:[#allocation5 + $0x4] sm:$0xf]
    %v403 = vld [vmem:[#allocation5 + $0x8] sm:$0xf]
    %v404 = vld [vmem:[#allocation5 + $0xc] sm:$0xf]
    %v405 = vld [vmem:[#allocation5 + $0x10] sm:$0xf]
    %v406 = vld [vmem:[#allocation5 + $0x14] sm:$0xf]
    %v407 = vld [vmem:[#allocation5 + $0x18] sm:$0xf]
    %v408 = vld [vmem:[#allocation5 + $0x1c] sm:$0xf]
    %v409 = vld [vmem:[#allocation5 + $0x20] sm:$0xf]
    %v410 = vld [vmem:[#allocation5 + $0x24] sm:$0xf]
    %v411 = vld [vmem:[#allocation5 + $0x28] sm:$0xf]
    %v412 = vld [vmem:[#allocation5 + $0x2c] sm:$0xf]
    %v413 = vld [vmem:[#allocation5 + $0x30] sm:$0xf]
    %v414 = vld [vmem:[#allocation5 + $0x34] sm:$0xf]
    %v415 = vld [vmem:[#allocation5 + $0x38] sm:$0xf]
    %v416 = vld [vmem:[#allocation5 + $0x3c] sm:$0xf]
    %v417 = vld [vmem:[%s6] sm:$0x1]
    %v419 = vlaneseq
    %v420 = vshrl.u32 %v419, 7
    %v421 = vsub.s32 0, %v420
    %v422 = vrot.slane %v417, %v421
    %v440 = vunpack.c.l.b16 %v401
    %v441 = vunpack.c.l.b16 %v402
    %v442 = vunpack.c.l.b16 %v403
    %v443 = vunpack.c.l.b16 %v404
    %v444 = vunpack.c.l.b16 %v405
    %v445 = vunpack.c.l.b16 %v406
    %v446 = vunpack.c.l.b16 %v407
    %v447 = vunpack.c.l.b16 %v408
    %v448 = vunpack.c.l.b16 %v409
    %v449 = vunpack.c.l.b16 %v410
    %v450 = vunpack.c.l.b16 %v411
    %v451 = vunpack.c.l.b16 %v412
    %v452 = vunpack.c.l.b16 %v413
    %v453 = vunpack.c.l.b16 %v414
    %v454 = vunpack.c.l.b16 %v415
    %v455 = vunpack.c.l.b16 %v416
    %v456 = vpack.c.b16 %v441, %v440
    %v457 = vpack.c.b16 %v443, %v442
    %v458 = vpack.c.b16 %v445, %v444
    %v459 = vpack.c.b16 %v447, %v446
    %v460 = vpack.c.b16 %v449, %v448
    %v461 = vpack.c.b16 %v451, %v450
    %v462 = vpack.c.b16 %v453, %v452
    %v463 = vpack.c.b16 %v455, %v454
    %472 = vmatprep.subr.bf16.mxu0 0
    %473 = vmatpush1.bf16.msra.mxu0 %v456
    %474 = vmatprep.subr.bf16.mxu0 0
    %475 = vmatpush1.bf16.msra.mxu0 %v457
    %476 = vmatprep.subr.bf16.mxu0 0
    %477 = vmatpush1.bf16.msra.mxu0 %v458
    %478 = vmatprep.subr.bf16.mxu0 0
    %479 = vmatpush1.bf16.msra.mxu0 %v459
    %480 = vmatprep.subr.bf16.mxu0 0
    %481 = vmatpush1.bf16.msra.mxu0 %v460
    %482 = vmatprep.subr.bf16.mxu0 0
    %483 = vmatpush1.bf16.msra.mxu0 %v461
    %484 = vmatprep.subr.bf16.mxu0 0
    %485 = vmatpush1.bf16.msra.mxu0 %v462
    %486 = vmatprep.subr.bf16.mxu0 0
    %487 = vmatpush1.bf16.msra.mxu0 %v463
    %488 = vmatprep.subr.bf16.mxu0 0
    %489 = vmatpush1.bf16.msra.mxu0 0
    %490 = vmatprep.subr.bf16.mxu0 0
    %491 = vmatpush1.bf16.msra.mxu0 0
    %492 = vmatprep.subr.bf16.mxu0 0
    %493 = vmatpush1.bf16.msra.mxu0 0
    %494 = vmatprep.subr.bf16.mxu0 0
    %495 = vmatpush1.bf16.msra.mxu0 0
    %496 = vmatprep.subr.bf16.mxu0 0
    %497 = vmatpush1.bf16.msra.mxu0 0
    %498 = vmatprep.subr.bf16.mxu0 0
    %499 = vmatpush1.bf16.msra.mxu0 0
    %500 = vmatprep.subr.bf16.mxu0 0
    %501 = vmatpush1.bf16.msra.mxu0 0
    %502 = vmatprep.subr.bf16.mxu0 0
    %503 = vmatpush1.bf16.msra.mxu0 0
    %504 = vmatprep.mubr.bf16.mxu0 0
    %505 = vmatmul.mubr.bf16.gmra.mrb[0].mxu0 %v399
    %v506 = vpop.f32.mrb[0].mxu0
    %v507 = vadd.f32 %v422, %v506
    %v508 = vpop.f32.mrb[0].mxu0
    %v509 = vpop.f32.mrb[0].mxu0
    %v510 = vadd.f32 %v422, %v509
    %v511 = vpop.f32.mrb[0].mxu0
    %512 = vmatprep.mubr.bf16.mxu0 0
    %513 = vmatmul.mubr.bf16.gmra.mrb[0].mxu0 %v400
    %v514 = vpop.f32.mrb[0].mxu0
    %v515 = vadd.f32 %v422, %v514
    %v516 = vpop.f32.mrb[0].mxu0
    %v517 = vpop.f32.mrb[0].mxu0
    %v518 = vadd.f32 %v422, %v517
    %v519 = vpop.f32.mrb[0].mxu0
    %520 = vdwg.mxu0
    %521 = vst [vmem:[#allocation7] sm:$0xff] %v507
    %522 = vst [vmem:[#allocation7 + $0x8] sm:$0xff] %v510
    %523 = vst [vmem:[#allocation7 + $0x10] sm:$0xff] %v515
    %524 = vst [vmem:[#allocation7 + $0x18] sm:$0xff] %v518
    // Predicated region
    $region38: #{tpu_custom_call.1} parent=1 // pred_check
      _
    $region39: #{tpu_custom_call.1} parent=1 // pred_check_branch
      %526 = sbr.rel (0) target = $region41
    $region40: #{tpu_custom_call.1} parent=1 // pred_region
      %s528 = ssub.s32 512, 512
      %529 = vsyncadd [#allocation4], %s528
      %s530 = sshll.u32 [#allocation7], 4
      %s531 = int_to_ptr.vmem [resolvable:$true] %s530
      %536 = dma.vmem_to_hbm [thread:$0]  %s531, 512, %s7, [#allocation4], 128, 128, 8
    $region41: #{tpu_custom_call.1} parent=1 // pred_fallthru
      _
    // Predicated region
    $region42: #{tpu_custom_call.1} parent=1 // pred_check
      _
    $region43: #{tpu_custom_call.1} parent=1 // pred_check_branch
      %538 = sbr.rel (0) target = $region45
    $region44: #{tpu_custom_call.1} parent=1 // pred_region
      %539 = dma.done [#allocation4], 512
    $region45: #{tpu_custom_call.1} parent=1 // pred_fallthru
      _
    %540 = vsyncpa [#allocation3], 1
    %541 = vsyncpa [#allocation6], 1
    %542 = vsyncpa [#allocation4], 1

</llo_original>
